<compile_context>
chip_gen: v7x
topology: tpu7x:2x2x1
jax: 0.10.0
libtpu: 0.0.40
codegen_flags: <defaults>
</compile_context>

<pallas_src>
import jax
import jax.numpy as jnp
from jax.experimental import pallas as pl
from jax.experimental.pallas import tpu as pltpu

CLIP_VALUE = 2.3


def _round_up(n, m):
    return ((n + m - 1) // m) * m


def _round_down(n, m):
    return (n // m) * m


def _feature_clipper_kernel(x_ref, o_ref, *, clip_value):
    x = x_ref[...].astype(jnp.float32)

    # Per-row squared L2 norm over the feature (lane) axis.
    sumsq = jnp.sum(x * x, axis=-1, keepdims=True)             # (TB, 1)

    # norm > clip  <=>  sumsq > clip^2   (no sqrt needed)
    # clip / norm  ==  clip * rsqrt(sumsq)  (EUP rsqrt, no VALU divide)
    inv_norm = jax.lax.rsqrt(jnp.maximum(sumsq, 1e-30))        # (TB, 1)
    scale = jnp.where(sumsq > clip_value * clip_value,
                      clip_value * inv_norm,
                      jnp.float32(1.0))                         # (TB, 1)

    o_ref[...] = (x * scale).astype(o_ref.dtype)                # one broadcast mul


def feature_clipper(x, clip_value=CLIP_VALUE, block_rows=None):
    """Clip the last-axis L2 norm of `x` to `clip_value`. Works for any rank >= 1."""
    orig_shape = x.shape
    d = orig_shape[-1]
    x2 = x.reshape(-1, d)
    rows = x2.shape[0]

    if block_rows is None:
        # Target ~2 MiB (f32) per input tile: big enough to sit near the HBM
        # roofline, small enough that double-buffered in + out tiles fit the
        # default scoped-VMEM budget comfortably (even at v7x's 64 MiB VMEM).
        target_bytes = 2 * 1024 * 1024
        block_rows = max(8, min(1024, _round_down(target_bytes // (4 * d), 8)))

    # Row tile: multiple of 8 (f32 sublane), capped by block_rows.
    tb = min(block_rows, _round_up(rows, 8))
    tb = max(8, _round_down(tb, 8))
    padded_rows = _round_up(rows, tb)
    if padded_rows != rows:
        x2 = jnp.pad(x2, ((0, padded_rows - rows), (0, 0)))

    grid = (padded_rows // tb,)

    kernel = lambda x_ref, o_ref: _feature_clipper_kernel(
        x_ref, o_ref, clip_value=float(clip_value)
    )

    out = pl.pallas_call(
        kernel,
        out_shape=jax.ShapeDtypeStruct((padded_rows, d), x.dtype),
        grid_spec=pltpu.PrefetchScalarGridSpec(
            num_scalar_prefetch=0,
            grid=grid,
            in_specs=[pl.BlockSpec((tb, d), lambda i: (i, 0))],
            out_specs=pl.BlockSpec((tb, d), lambda i: (i, 0)),
        ),
        compiler_params=pltpu.CompilerParams(
            # Row tiles are fully independent -> shard across TensorCores on v7x.
            dimension_semantics=("parallel",),
        ),
    )(x2)

    if padded_rows != rows:
        out = out[:rows]
    return out.reshape(orig_shape)


def _reference(x, clip_value=CLIP_VALUE):
    """Pure-JAX mirror of the PyTorch FeatureClipper.forward."""
    norm = jnp.linalg.norm(x, axis=-1, keepdims=True)
    safe = jnp.maximum(norm, 1e-30)
    return jnp.where(norm > clip_value, clip_value * x / safe, x)


if __name__ == "__main__":
    key = jax.random.PRNGKey(0)

    # Test 1: lane-dense hidden=128; rows chosen so that with block_rows=128
    # we get multiple pipelined grid steps AND a padded tail row-tile
    # (8*65 = 520 rows -> pad to 640, 5 steps), exercising the slice-back path.
    B, S, D = 8, 65, 128
    x = jax.random.normal(key, (B, S, D), dtype=jnp.float32)
    # Mix of rows above / below the clip threshold.
    row_scale = jnp.where(jnp.arange(S)[None, :, None] % 2 == 0, 1.0, 0.1)
    x = x * row_scale

    y = feature_clipper(x, clip_value=CLIP_VALUE, block_rows=128)
    y = jax.block_until_ready(y)
    y_ref = _reference(x, clip_value=CLIP_VALUE)
    assert y.shape == x.shape
    assert bool(jnp.all(jnp.isfinite(y)))
    assert jnp.allclose(y, y_ref, atol=1e-5, rtol=1e-5)
    norms = jnp.linalg.norm(y, axis=-1)
    assert bool(jnp.all(norms <= CLIP_VALUE + 1e-4))

    # Test 2: feature dim not a multiple of 128 (full-dim block path) with
    # the default (adaptive) row tile.
    B2, S2, D2 = 2, 16, 96
    x2 = 3.0 * jax.random.normal(jax.random.PRNGKey(1), (B2, S2, D2), dtype=jnp.float32)
    y2 = jax.block_until_ready(feature_clipper(x2, clip_value=CLIP_VALUE))
    assert jnp.allclose(y2, _reference(x2, clip_value=CLIP_VALUE), atol=1e-5, rtol=1e-5)

    print("KERNEL_OK")
</pallas_src>

<mosaic_0001>
module attributes {stable_mosaic.version = 11 : i64} {
  func.func @_lambda_(%arg0: i32, %arg1: memref<128x128xf32, #tpu.memory_space<vmem>>, %arg2: memref<128x128xf32, #tpu.memory_space<vmem>>) attributes {dimension_semantics = [#tpu.dimension_semantics<parallel>], iteration_bounds = array<i64: 5>, scalar_prefetch = 0 : i64, scratch_operands = 0 : i64, tpu.core_type = #tpu.core_type<tc>, window_params = [{transform_indices = @transform_0, window_bounds = array<i64: 128, 128>}, {transform_indices = @transform_1, window_bounds = array<i64: 128, 128>}]} {
    %c0 = arith.constant 0 : index
    %c0_0 = arith.constant 0 : index
    %0 = vector.load %arg1[%c0, %c0_0] : memref<128x128xf32, #tpu.memory_space<vmem>>, vector<128x128xf32>
    %1 = arith.mulf %0, %0 : vector<128x128xf32>
    %cst = arith.constant dense<0.000000e+00> : vector<128xf32>
    %2 = vector.multi_reduction <add>, %1, %cst [1] : vector<128x128xf32> to vector<128xf32>
    %3 = vector.shape_cast %2 : vector<128xf32> to vector<128x1xf32>
    %cst_1 = arith.constant 1.000000e-30 : f32
    %4 = vector.broadcast %cst_1 : f32 to vector<128x1xf32>
    %5 = arith.maximumf %3, %4 : vector<128x1xf32>
    %6 = math.rsqrt %5 : vector<128x1xf32>
    %cst_2 = arith.constant 5.290000e+00 : f32
    %7 = vector.broadcast %cst_2 : f32 to vector<128x1xf32>
    %8 = arith.cmpf ogt, %3, %7 : vector<128x1xf32>
    %cst_3 = arith.constant 2.300000e+00 : f32
    %9 = vector.broadcast %cst_3 : f32 to vector<128x1xf32>
    %10 = arith.mulf %9, %6 : vector<128x1xf32>
    %cst_4 = arith.constant 1.000000e+00 : f32
    %11 = vector.broadcast %cst_4 : f32 to vector<128x1xf32>
    %12 = arith.select %8, %10, %11 : vector<128x1xi1>, vector<128x1xf32>
    %13 = vector.broadcast %12 : vector<128x1xf32> to vector<128x128xf32>
    %14 = arith.mulf %0, %13 : vector<128x128xf32>
    %c0_5 = arith.constant 0 : index
    %c0_6 = arith.constant 0 : index
    %15 = vector.load %arg2[%c0_5, %c0_6] : memref<128x128xf32, #tpu.memory_space<vmem>>, vector<128x128xf32>
    tpu.vector_store %arg2[%c0_5, %c0_6], %14 {strides = array<i32>} : memref<128x128xf32, #tpu.memory_space<vmem>>, vector<128x128xf32>,
    return
  }
  func.func @transform_0(%arg0: i32) -> (i32, i32) {
    %c0_i32 = arith.constant 0 : i32
    %c0_i32_0 = arith.constant 0 : i32
    return %arg0, %c0_i32 : i32, i32
  }
  func.func @transform_1(%arg0: i32) -> (i32, i32) {
    %c0_i32 = arith.constant 0 : i32
    %c0_i32_0 = arith.constant 0 : i32
    return %arg0, %c0_i32 : i32, i32
  }
}

</mosaic_0001>

<llo_original>
// kernel: tpu_custom_call.1
$region0: #{tpu_custom_call.1}
  #allocation0 [shape = 'u32[]', space=smem, size = 0x4, offset = 0x4, fixed_abs, tag = 'smem constant byte address 0x4 - core index']
  #allocation1 [shape = 'u32[144,128]{1,0:T(1,128)}', space=vmem, size = 0x12000, scoped, tag = 'internal scratch']
  %s0 = inlined_call_operand.hbm [shape: f32[640,128], index: 0, kind: input, shape index: {}]
  %s1 = inlined_call_operand.hbm [shape: f32[640,128], index: 1, kind: output, shape index: {}]
  %s2 = sld [smem:[#allocation0]]
  $region41: #{tpu_custom_call.1} parent=0
    _
  %s4 = ssub.s32 1, %s2
  %s5 = scalar_select 0, %s4, %s2
  $region1: #{tpu_custom_call.1} parent=0
    #allocation2 [shape = 'u8[131072]{0}', space=vmem, size = 0x20000, scoped, tag = 'input window, operand 0']
    #allocation3 [shape = 's32[2]{0}', space=sflag, size = 0x8, scoped, tag = 'scoped memory for tpu_custom_call.1']
    #allocation4 [shape = 's32[2]{0}', space=sflag, size = 0x8, scoped, tag = 'scoped memory for tpu_custom_call.1']
    #allocation5 [shape = 'u8[131072]{0}', space=vmem, size = 0x20000, scoped, tag = 'output window, operand 0']
    %6 = vsyncpa [#allocation3], 0
    %s7 = scalar_lea.sflag [#allocation3], 1
    %8 = vsyncpa %s7, 0
    %9 = vsyncpa [#allocation4], 0
    %s10 = scalar_lea.sflag [#allocation4], 1
    %11 = vsyncpa %s10, 0
    loop: start=0, step=1, limit=7
    $region2: #{tpu_custom_call.1} parent=1 // loop_pre_header
      _
    $region3: #{tpu_custom_call.1} parent=1 // loop_header
      %s13 = sphi 0, %s17
      %p14 = scmp.ge.s32.totalorder %s13, 7
      %s23 = sphi 0, %s25
      %s26 = sphi 0, %s23
      %s27 = sphi 0, %s26
      %s43 = sphi 0, %s27
      %s49 = sphi 0, %s51
      %s52 = sphi 0, %s49
      %s53 = sphi 0, %s52
      %s69 = sphi 0, %s53
    $region4: #{tpu_custom_call.1} parent=1 // loop_header_branch
      %16 = sbr.rel (%p14) target = $region8
    $region5: #{tpu_custom_call.1} parent=1 // loop_body
      %s18 = ssub.s32 %s13, 1
      %s19 = ssub.s32 %s13, 2
      %s20 = sadd.s32 %s13, 1
      %s21 = ssub.s32 %s13, %s20
      %p22 = scmp.eq.s32.totalorder %s21, 0
      %s24 = sadd.s32 %s23, 1
      %s25 = scalar_select %p22, %s23, %s24
      %p28 = pneg %p22
      %p29 = scmp.eq.s32.totalorder %s13, 4
      %p30 = por %p28, %p29
      %p31 = scmp.ne.s32.totalorder %s23, %s26
      %p32 = scmp.eq.s32.totalorder %s13, 0
      %p33 = por %p31, %p32
      %p34 = scmp.ne.s32.totalorder %s23, %s26
      %p35 = scmp.eq.s32.totalorder %s18, 4
      %p36 = por %p34, %p35
      %p37 = scmp.ne.s32.totalorder %s26, %s27
      %p38 = scmp.eq.s32.totalorder %s18, 0
      %p39 = por %p37, %p38
      %p40 = scmp.ne.s32.totalorder %s26, %s27
      %p41 = scmp.eq.s32.totalorder %s19, 4
      %p42 = por %p40, %p41
      %p44 = scmp.ne.s32.totalorder %s27, %s43
      %p45 = scmp.eq.s32.totalorder %s19, 0
      %p46 = por %p44, %p45
      %s47 = ssub.s32 %s13, %s20
      %p48 = scmp.eq.s32.totalorder %s47, 0
      %s50 = sadd.s32 %s49, 1
      %s51 = scalar_select %p48, %s49, %s50
      %p54 = pneg %p48
      %p55 = scmp.eq.s32.totalorder %s13, 4
      %p56 = por %p54, %p55
      %p57 = scmp.ne.s32.totalorder %s49, %s52
      %p58 = scmp.eq.s32.totalorder %s13, 0
      %p59 = por %p57, %p58
      %p60 = scmp.ne.s32.totalorder %s49, %s52
      %p61 = scmp.eq.s32.totalorder %s18, 4
      %p62 = por %p60, %p61
      %p63 = scmp.ne.s32.totalorder %s52, %s53
      %p64 = scmp.eq.s32.totalorder %s18, 0
      %p65 = por %p63, %p64
      %p66 = scmp.ne.s32.totalorder %s52, %s53
      %p67 = scmp.eq.s32.totalorder %s19, 4
      %p68 = por %p66, %p67
      %p70 = scmp.ne.s32.totalorder %s53, %s69
      %p71 = scmp.eq.s32.totalorder %s19, 0
      %p72 = por %p70, %p71
      %p73 = scmp.le.s32.totalorder 1, %s13
      %p74 = scmp.lt.s32.totalorder %s13, 6
      %p75 = pnand %p73, %p74
      %p76 = pneg %p75
      // Predicated region
      $region9: #{tpu_custom_call.1} parent=5 // pred_check
        _
      $region10: #{tpu_custom_call.1} parent=5 // pred_check_branch
        %78 = sbr.rel (%p75) target = $region12
      $region11: #{tpu_custom_call.1} parent=5 // pred_region
        %s79 = ssub.s32 %s13, 1
      $region12: #{tpu_custom_call.1} parent=5 // pred_fallthru
        _
      %p80 = scmp.lt.s32.totalorder %s13, 5
      // Predicated region
      $region13: #{tpu_custom_call.1} parent=5 // pred_check
        %p81 = pneg %p80
      $region14: #{tpu_custom_call.1} parent=5 // pred_check_branch
        %83 = sbr.rel (%p81) target = $region16
      $region15: #{tpu_custom_call.1} parent=5 // pred_region
        // Predicated region
        $region17: #{tpu_custom_call.1} parent=15 // pred_check
          %p84 = pneg %p33
        $region18: #{tpu_custom_call.1} parent=15 // pred_check_branch
          %86 = sbr.rel (%p84) target = $region20
        $region19: #{tpu_custom_call.1} parent=15 // pred_region
          %s87 = sand.u32 %s23, 1
          %s88 = scalar_lea.sflag [#allocation3], %s87
          %s89 = sand.u32 %s23, 1
          %s90 = smul.addr %s89, 128
          %s91 = scalar_lea.vmem [#allocation2], %s90
          %s92 = smul.u32 16, %s13
          %s94 = ssub.s32 2048, 2048
          %95 = vsyncadd %s88, %s94
          %s96 = smul.addr %s92, 128
          %s97 = scalar_lea.hbm %s0, %s96
          %s98 = sshll.u32 %s91, 4
          %s99 = int_to_ptr.vmem [resolvable:$true] %s98
          %104 = dma.hbm_to_vmem [thread:$0]  %s97, 2048, %s99, %s88, 128, 128, 8
        $region20: #{tpu_custom_call.1} parent=15 // pred_fallthru
          _
      $region16: #{tpu_custom_call.1} parent=5 // pred_fallthru
        _
      %p105 = scmp.le.s32.totalorder 1, %s13
      %p106 = scmp.lt.s32.totalorder %s13, 6
      %p107 = pnand %p105, %p106
      %p108 = pneg %p107
      // Predicated region
      $region21: #{tpu_custom_call.1} parent=5 // pred_check
        _
      $region22: #{tpu_custom_call.1} parent=5 // pred_check_branch
        %110 = sbr.rel (%p107) target = $region24
      $region23: #{tpu_custom_call.1} parent=5 // pred_region
        %s111 = ssub.s32 %s13, 1
        %s112 = sand.u32 %s26, 1
        %s113 = scalar_lea.sflag [#allocation3], %s112
        %s114 = sand.u32 %s26, 1
        %s115 = smul.addr %s114, 128
        %s116 = scalar_lea.vmem [#allocation2], %s115
        // Predicated region
        $region25: #{tpu_custom_call.1} parent=23 // pred_check
          %p117 = pneg %p39
        $region26: #{tpu_custom_call.1} parent=23 // pred_check_branch
          %119 = sbr.rel (%p117) target = $region28
        $region27: #{tpu_custom_call.1} parent=23 // pred_region
          %120 = dma.done %s113, 2048
        $region28: #{tpu_custom_call.1} parent=23 // pred_fallthru
          _
        %s121 = sand.u32 %s26, 1
        %s122 = scalar_lea.sflag [#allocation3], %s121
        %s123 = sand.u32 %s26, 1
        %s124 = smul.addr %s123, 128
        %s125 = scalar_lea.vmem [#allocation2], %s124
        %p126 = pneg %p39
        %p127 = pneg %p36
        %p128 = pneg %p65
        %p129 = pneg %p62
        %s130 = sand.u32 %s52, 1
        %s131 = scalar_lea.sflag [#allocation4], %s130
        %s132 = sand.u32 %s52, 1
        %s133 = smul.addr %s132, 128
        %s134 = scalar_lea.vmem [#allocation5], %s133
        %s135 = smul.u32 16, %s18
        %s136 = smul.u32 16, %s18
        %v137 = vld [vmem:[%s116] sm:$0xff]
        %v138 = vld [vmem:[%s116 + $0x8] sm:$0xff]
        %v139 = vld [vmem:[%s116 + $0x10] sm:$0xff]
        %v140 = vld [vmem:[%s116 + $0x18] sm:$0xff]
        %v141 = vld [vmem:[%s116 + $0x20] sm:$0xff]
        %v142 = vld [vmem:[%s116 + $0x28] sm:$0xff]
        %v143 = vld [vmem:[%s116 + $0x30] sm:$0xff]
        %v144 = vld [vmem:[%s116 + $0x38] sm:$0xff]
        %v145 = vld [vmem:[%s116 + $0x40] sm:$0xff]
        %v146 = vld [vmem:[%s116 + $0x48] sm:$0xff]
        %v147 = vld [vmem:[%s116 + $0x50] sm:$0xff]
        %v148 = vld [vmem:[%s116 + $0x58] sm:$0xff]
        %v149 = vld [vmem:[%s116 + $0x60] sm:$0xff]
        %v150 = vld [vmem:[%s116 + $0x68] sm:$0xff]
        %v151 = vld [vmem:[%s116 + $0x70] sm:$0xff]
        %v152 = vld [vmem:[%s116 + $0x78] sm:$0xff]
        %v153 = vmul.f32 %v137, %v137
        %v154 = vmul.f32 %v138, %v138
        %v155 = vmul.f32 %v139, %v139
        %v156 = vmul.f32 %v140, %v140
        %v157 = vmul.f32 %v141, %v141
        %v158 = vmul.f32 %v142, %v142
        %v159 = vmul.f32 %v143, %v143
        %v160 = vmul.f32 %v144, %v144
        %v161 = vmul.f32 %v145, %v145
        %v162 = vmul.f32 %v146, %v146
        %v163 = vmul.f32 %v147, %v147
        %v164 = vmul.f32 %v148, %v148
        %v165 = vmul.f32 %v149, %v149
        %v166 = vmul.f32 %v150, %v150
        %v167 = vmul.f32 %v151, %v151
        %v168 = vmul.f32 %v152, %v152
        %169 = vadd.xlane.f32.xlu0 %v153
        %v170 = vpop.xlane.xlu0 %169
        %171 = vadd.xlane.f32.xlu0 %v154
        %v172 = vpop.xlane.xlu0 %171
        %173 = vadd.xlane.f32.xlu0 %v155
        %v174 = vpop.xlane.xlu0 %173
        %175 = vadd.xlane.f32.xlu0 %v156
        %v176 = vpop.xlane.xlu0 %175
        %177 = vadd.xlane.f32.xlu0 %v157
        %v178 = vpop.xlane.xlu0 %177
        %179 = vadd.xlane.f32.xlu0 %v158
        %v180 = vpop.xlane.xlu0 %179
        %181 = vadd.xlane.f32.xlu0 %v159
        %v182 = vpop.xlane.xlu0 %181
        %183 = vadd.xlane.f32.xlu0 %v160
        %v184 = vpop.xlane.xlu0 %183
        %185 = vadd.xlane.f32.xlu0 %v161
        %v186 = vpop.xlane.xlu0 %185
        %187 = vadd.xlane.f32.xlu0 %v162
        %v188 = vpop.xlane.xlu0 %187
        %189 = vadd.xlane.f32.xlu0 %v163
        %v190 = vpop.xlane.xlu0 %189
        %191 = vadd.xlane.f32.xlu0 %v164
        %v192 = vpop.xlane.xlu0 %191
        %193 = vadd.xlane.f32.xlu0 %v165
        %v194 = vpop.xlane.xlu0 %193
        %195 = vadd.xlane.f32.xlu0 %v166
        %v196 = vpop.xlane.xlu0 %195
        %197 = vadd.xlane.f32.xlu0 %v167
        %v198 = vpop.xlane.xlu0 %197
        %199 = vadd.xlane.f32.xlu0 %v168
        %v200 = vpop.xlane.xlu0 %199
        %v201 = vmax.f32 %v170, 1e-30
        %v202 = vmax.f32 %v172, 1e-30
        %v203 = vmax.f32 %v174, 1e-30
        %v204 = vmax.f32 %v176, 1e-30
        %v205 = vmax.f32 %v178, 1e-30
        %v206 = vmax.f32 %v180, 1e-30
        %v207 = vmax.f32 %v182, 1e-30
        %v208 = vmax.f32 %v184, 1e-30
        %v209 = vmax.f32 %v186, 1e-30
        %v210 = vmax.f32 %v188, 1e-30
        %v211 = vmax.f32 %v190, 1e-30
        %v212 = vmax.f32 %v192, 1e-30
        %v213 = vmax.f32 %v194, 1e-30
        %v214 = vmax.f32 %v196, 1e-30
        %v215 = vmax.f32 %v198, 1e-30
        %v216 = vmax.f32 %v200, 1e-30
        %v217 = vrsqrt.pop %v201
        %v218 = vrsqrt.pop %v202
        %v219 = vrsqrt.pop %v203
        %v220 = vrsqrt.pop %v204
        %v221 = vrsqrt.pop %v205
        %v222 = vrsqrt.pop %v206
        %v223 = vrsqrt.pop %v207
        %v224 = vrsqrt.pop %v208
        %v225 = vrsqrt.pop %v209
        %v226 = vrsqrt.pop %v210
        %v227 = vrsqrt.pop %v211
        %v228 = vrsqrt.pop %v212
        %v229 = vrsqrt.pop %v213
        %v230 = vrsqrt.pop %v214
        %v231 = vrsqrt.pop %v215
        %v232 = vrsqrt.pop %v216
        %vm233 = vcmp.gt.f32.partialorder %v170, 5.29
        %vm234 = vcmp.gt.f32.partialorder %v172, 5.29
        %vm235 = vcmp.gt.f32.partialorder %v174, 5.29
        %vm236 = vcmp.gt.f32.partialorder %v176, 5.29
        %vm237 = vcmp.gt.f32.partialorder %v178, 5.29
        %vm238 = vcmp.gt.f32.partialorder %v180, 5.29
        %vm239 = vcmp.gt.f32.partialorder %v182, 5.29
        %vm240 = vcmp.gt.f32.partialorder %v184, 5.29
        %vm241 = vcmp.gt.f32.partialorder %v186, 5.29
        %vm242 = vcmp.gt.f32.partialorder %v188, 5.29
        %vm243 = vcmp.gt.f32.partialorder %v190, 5.29
        %vm244 = vcmp.gt.f32.partialorder %v192, 5.29
        %vm245 = vcmp.gt.f32.partialorder %v194, 5.29
        %vm246 = vcmp.gt.f32.partialorder %v196, 5.29
        %vm247 = vcmp.gt.f32.partialorder %v198, 5.29
        %vm248 = vcmp.gt.f32.partialorder %v200, 5.29
        %v249 = vmul.f32 %v217, 2.3
        %v250 = vmul.f32 %v218, 2.3
        %v251 = vmul.f32 %v219, 2.3
        %v252 = vmul.f32 %v220, 2.3
        %v253 = vmul.f32 %v221, 2.3
        %v254 = vmul.f32 %v222, 2.3
        %v255 = vmul.f32 %v223, 2.3
        %v256 = vmul.f32 %v224, 2.3
        %v257 = vmul.f32 %v225, 2.3
        %v258 = vmul.f32 %v226, 2.3
        %v259 = vmul.f32 %v227, 2.3
        %v260 = vmul.f32 %v228, 2.3
        %v261 = vmul.f32 %v229, 2.3
        %v262 = vmul.f32 %v230, 2.3
        %v263 = vmul.f32 %v231, 2.3
        %v264 = vmul.f32 %v232, 2.3
        %v265 = vsel %vm233, %v249, 1.0
        %v266 = vsel %vm234, %v250, 1.0
        %v267 = vsel %vm235, %v251, 1.0
        %v268 = vsel %vm236, %v252, 1.0
        %v269 = vsel %vm237, %v253, 1.0
        %v270 = vsel %vm238, %v254, 1.0
        %v271 = vsel %vm239, %v255, 1.0
        %v272 = vsel %vm240, %v256, 1.0
        %v273 = vsel %vm241, %v257, 1.0
        %v274 = vsel %vm242, %v258, 1.0
        %v275 = vsel %vm243, %v259, 1.0
        %v276 = vsel %vm244, %v260, 1.0
        %v277 = vsel %vm245, %v261, 1.0
        %v278 = vsel %vm246, %v262, 1.0
        %v279 = vsel %vm247, %v263, 1.0
        %v280 = vsel %vm248, %v264, 1.0
        %v281 = vmul.f32 %v137, %v265
        %v282 = vmul.f32 %v138, %v266
        %v283 = vmul.f32 %v139, %v267
        %v284 = vmul.f32 %v140, %v268
        %v285 = vmul.f32 %v141, %v269
        %v286 = vmul.f32 %v142, %v270
        %v287 = vmul.f32 %v143, %v271
        %v288 = vmul.f32 %v144, %v272
        %v289 = vmul.f32 %v145, %v273
        %v290 = vmul.f32 %v146, %v274
        %v291 = vmul.f32 %v147, %v275
        %v292 = vmul.f32 %v148, %v276
        %v293 = vmul.f32 %v149, %v277
        %v294 = vmul.f32 %v150, %v278
        %v295 = vmul.f32 %v151, %v279
        %v296 = vmul.f32 %v152, %v280
        %297 = vst [vmem:[%s134] sm:$0xff] %v281
        %298 = vst [vmem:[%s134 + $0x8] sm:$0xff] %v282
        %299 = vst [vmem:[%s134 + $0x10] sm:$0xff] %v283
        %300 = vst [vmem:[%s134 + $0x18] sm:$0xff] %v284
        %301 = vst [vmem:[%s134 + $0x20] sm:$0xff] %v285
        %302 = vst [vmem:[%s134 + $0x28] sm:$0xff] %v286
        %303 = vst [vmem:[%s134 + $0x30] sm:$0xff] %v287
        %304 = vst [vmem:[%s134 + $0x38] sm:$0xff] %v288
        %305 = vst [vmem:[%s134 + $0x40] sm:$0xff] %v289
        %306 = vst [vmem:[%s134 + $0x48] sm:$0xff] %v290
        %307 = vst [vmem:[%s134 + $0x50] sm:$0xff] %v291
        %308 = vst [vmem:[%s134 + $0x58] sm:$0xff] %v292
        %309 = vst [vmem:[%s134 + $0x60] sm:$0xff] %v293
        %310 = vst [vmem:[%s134 + $0x68] sm:$0xff] %v294
        %311 = vst [vmem:[%s134 + $0x70] sm:$0xff] %v295
        %312 = vst [vmem:[%s134 + $0x78] sm:$0xff] %v296
        %s313 = sand.u32 %s52, 1
        %s314 = scalar_lea.sflag [#allocation4], %s313
        %s315 = sand.u32 %s52, 1
        %s316 = smul.addr %s315, 128
        %s317 = scalar_lea.vmem [#allocation5], %s316
        // Predicated region
        $region29: #{tpu_custom_call.1} parent=23 // pred_check
          %p318 = pneg %p62
        $region30: #{tpu_custom_call.1} parent=23 // pred_check_branch
          %320 = sbr.rel (%p318) target = $region32
        $region31: #{tpu_custom_call.1} parent=23 // pred_region
          %s321 = smul.u32 16, %s18
          %s323 = ssub.s32 2048, 2048
          %324 = vsyncadd %s314, %s323
          %s325 = smul.addr %s321, 128
          %s326 = scalar_lea.hbm %s1, %s325
          %s327 = sshll.u32 %s317, 4
          %s328 = int_to_ptr.vmem [resolvable:$true] %s327
          %333 = dma.vmem_to_hbm [thread:$0]  %s328, 2048, %s326, %s314, 128, 128, 8
        $region32: #{tpu_custom_call.1} parent=23 // pred_fallthru
          _
      $region24: #{tpu_custom_call.1} parent=5 // pred_fallthru
        _
      %p334 = scmp.le.s32.totalorder 2, %s13
      // Predicated region
      $region33: #{tpu_custom_call.1} parent=5 // pred_check
        %p335 = pneg %p334
      $region34: #{tpu_custom_call.1} parent=5 // pred_check_branch
        %337 = sbr.rel (%p335) target = $region36
      $region35: #{tpu_custom_call.1} parent=5 // pred_region
        %s338 = ssub.s32 %s13, 2
        // Predicated region
        $region37: #{tpu_custom_call.1} parent=35 // pred_check
          %p339 = pneg %p68
        $region38: #{tpu_custom_call.1} parent=35 // pred_check_branch
          %341 = sbr.rel (%p339) target = $region40
        $region39: #{tpu_custom_call.1} parent=35 // pred_region
          %s342 = sand.u32 %s53, 1
          %s343 = scalar_lea.sflag [#allocation4], %s342
          %s344 = sand.u32 %s53, 1
          %s345 = smul.addr %s344, 128
          %s346 = scalar_lea.vmem [#allocation5], %s345
          %347 = dma.done %s343, 2048
        $region40: #{tpu_custom_call.1} parent=35 // pred_fallthru
          _
      $region36: #{tpu_custom_call.1} parent=5 // pred_fallthru
        _
    $region6: #{tpu_custom_call.1} parent=1 // loop_footer
      %s17 = sadd.s32 1, %s13
    $region7: #{tpu_custom_call.1} parent=1 // loop_footer_branch
      %12 = sbr.rel target = $region3
    $region8: #{tpu_custom_call.1} parent=1 // loop_exit
      _
    %348 = vsyncpa [#allocation3], 1
    %s349 = scalar_lea.sflag [#allocation3], 1
    %350 = vsyncpa %s349, 1
    %351 = vsyncpa [#allocation4], 1
    %s352 = scalar_lea.sflag [#allocation4], 1
    %353 = vsyncpa %s352, 1

</llo_original>
